<compile_context>
chip_gen: v7x
topology: tpu7x:2x2x1
jax: 0.10.0
libtpu: 0.0.40
codegen_flags: <defaults>
</compile_context>

<pallas_src>
import functools
import math

import jax
import jax.numpy as jnp
from jax.experimental import pallas as pl
from jax.experimental.pallas import tpu as pltpu

TAU = 0.2      # self.tau == initial_tau (update_temperature never called)
ALPHA = 0.8
EPS = 1e-8     # F.cosine_similarity eps


def _round_up(x, m):
    return ((x + m - 1) // m) * m


def _pick_tile(dim, target):
    """(tile, padded_dim): full-dim block if small, else an aligned `target` tile."""
    if dim <= target:
        return dim, dim
    return target, _round_up(dim, target)


# ---------------------------------------------------------------------------
# Kernel 0 (prologue): row-normalize x -> x * rsqrt(max(|x|^2, eps^2)).
# Emits both an f32 copy (exact positive-pair sims) and a compute-dtype copy
# (bf16 MXU operand) in a single pass.
# ---------------------------------------------------------------------------
def _normalize_kernel(x_ref, o32_ref, ocd_ref):
    x = x_ref[...]                                            # (tb, D) f32
    nsq = jnp.sum(x * x, axis=1, keepdims=True)               # (tb, 1)
    xn = x * jax.lax.rsqrt(jnp.maximum(nsq, EPS * EPS))
    o32_ref[...] = xn
    ocd_ref[...] = xn.astype(ocd_ref.dtype)


# ---------------------------------------------------------------------------
# Kernel 1 (train): rows = where(mask, 0, exp(cos/tau)) for the 2P selected
# rows.  Mask is built in-kernel from (tm,1) sel/par index columns + iota.
# ---------------------------------------------------------------------------
def _rows_kernel(lhs_ref, rhs_ref, sel_ref, par_ref, out_ref,
                 *, n_rows, n_cols, inv_tau):
    i = pl.program_id(0)
    j = pl.program_id(1)
    tm, tn = out_ref.shape
    s = jax.lax.dot_general(                                   # MXU (tm,D)x(tn,D)^T
        lhs_ref[...], rhs_ref[...],
        (((1,), (1,)), ((), ())),
        preferred_element_type=jnp.float32)
    e = jnp.exp(s * inv_tau)                                   # EUP, 1/tau fused
    col = jax.lax.broadcasted_iota(jnp.int32, (tm, tn), 1) + j * tn
    row = jax.lax.broadcasted_iota(jnp.int32, (tm, tn), 0) + i * tm
    masked = ((col == sel_ref[...]) | (col == par_ref[...])
              | (col >= n_cols) | (row >= n_rows))
    out_ref[...] = jnp.where(masked, 0.0, e)


# ---------------------------------------------------------------------------
# Kernel 1' (eval/val, fused): same matmul+exp+mask, reduced across the column
# grid axis into a (tm,1) scratch; per-row losses emitted at the last tile.
# ---------------------------------------------------------------------------
def _fused_loss_kernel(lhs_ref, rhs_ref, sel_ref, par_ref, pos_ref, out_ref,
                       acc_ref, *, n_rows, n_cols, inv_tau):
    i = pl.program_id(0)
    j = pl.program_id(1)
    tm = lhs_ref.shape[0]
    tn = rhs_ref.shape[0]

    @pl.when(j == 0)
    def _():
        acc_ref[...] = jnp.zeros_like(acc_ref)

    s = jax.lax.dot_general(
        lhs_ref[...], rhs_ref[...],
        (((1,), (1,)), ((), ())),
        preferred_element_type=jnp.float32)
    e = jnp.exp(s * inv_tau)
    col = jax.lax.broadcasted_iota(jnp.int32, (tm, tn), 1) + j * tn
    row = jax.lax.broadcasted_iota(jnp.int32, (tm, tn), 0) + i * tm
    masked = ((col == sel_ref[...]) | (col == par_ref[...])
              | (col >= n_cols) | (row >= n_rows))
    acc_ref[...] += jnp.sum(jnp.where(masked, 0.0, e), axis=1, keepdims=True)

    @pl.when(j == pl.num_programs(1) - 1)
    def _():
        p = pos_ref[...]                                       # (tm, 1)
        out_ref[...] = -jnp.log(p / (p + acc_ref[...]))        # padded rows -> 0


# ---------------------------------------------------------------------------
# Kernel 2 (train): threshold + sum, column-tiled with a (tm,1) accumulator;
# per-row losses emitted at the last column tile (row axis stays "parallel").
# ---------------------------------------------------------------------------
def _loss_kernel(rows_ref, thr_ref, pos_ref, out_ref, acc_ref):
    j = pl.program_id(1)

    @pl.when(j == 0)
    def _():
        acc_ref[...] = jnp.zeros_like(acc_ref)

    e = rows_ref[...]                                          # (tm, tn)
    thr = thr_ref[...]                                         # (tm, 1)
    acc_ref[...] += jnp.sum(jnp.where(e >= thr, e, 0.0), axis=1, keepdims=True)

    @pl.when(j == pl.num_programs(1) - 1)
    def _():
        p = pos_ref[...]
        out_ref[...] = -jnp.log(p / (p + acc_ref[...]))


@functools.partial(jax.jit,
                   static_argnames=("stage", "tau", "alpha", "compute_dtype"))
def hard_contrastive_loss_v3(embeddings, positive_pairs, stage,
                             tau=TAU, alpha=ALPHA,
                             compute_dtype=jnp.bfloat16):
    embeddings = embeddings.astype(jnp.float32)
    B, D = embeddings.shape
    P = positive_pairs.shape[0]
    n_rows = 2 * P
    i_idx = positive_pairs[:, 0].astype(jnp.int32)
    j_idx = positive_pairs[:, 1].astype(jnp.int32)
    sel = jnp.concatenate([i_idx, j_idx])                      # LHS row per loss row
    par = jnp.concatenate([j_idx, i_idx])                      # its positive partner

    # MXU-aligned tiles; shrink the target when D is large so the (tm,D)+(tn,D)
    # operand blocks stay inside the default scoped VMEM on all generations.
    # TODO(synk): for very large D, tile D as a K grid axis with an f32 acc.
    target = 256 if D <= 2048 else 128
    tm, Pm = _pick_tile(n_rows, target)   # row tiles (sublane axis)
    tn, Bp = _pick_tile(B, target)        # col tiles (lane axis)
    inv_tau = 1.0 / float(tau)

    # ---- prologue: tiled row normalization (f32 + bf16 copies, one pass) ----
    x_p = jnp.pad(embeddings, ((0, Bp - B), (0, 0)))
    xn32, xn_cd = pl.pallas_call(
        _normalize_kernel,
        grid=(Bp // tn,),
        in_specs=[pl.BlockSpec((tn, D), lambda i: (i, 0))],
        out_specs=[pl.BlockSpec((tn, D), lambda i: (i, 0)),
                   pl.BlockSpec((tn, D), lambda i: (i, 0))],
        out_shape=(jax.ShapeDtypeStruct((Bp, D), jnp.float32),
                   jax.ShapeDtypeStruct((Bp, D), compute_dtype)),
        compiler_params=pltpu.CompilerParams(
            dimension_semantics=("parallel",)),
    )(x_p)

    # One gather of the selected rows, reused for pos and the matmul LHS.
    g_sel = xn32[sel]                                          # (2P, D) f32
    pos = jnp.exp(jnp.sum(g_sel * xn32[par], axis=1) * inv_tau)  # (2P,)

    lhs_p = jnp.pad(g_sel.astype(compute_dtype), ((0, Pm - n_rows), (0, 0)))
    sel_col = jnp.pad(sel, (0, Pm - n_rows))[:, None]          # (Pm, 1) int32
    par_col = jnp.pad(par, (0, Pm - n_rows))[:, None]
    pos_col = jnp.pad(pos, (0, Pm - n_rows), constant_values=1.0)[:, None]

    grid = (Pm // tm, Bp // tn)
    row_spec = pl.BlockSpec((tm, D), lambda i, j: (i, 0))
    col_spec = pl.BlockSpec((tn, D), lambda i, j: (j, 0))
    idx_spec = pl.BlockSpec((tm, 1), lambda i, j: (i, 0))
    tile_spec = pl.BlockSpec((tm, tn), lambda i, j: (i, j))
    out_row_spec = pl.BlockSpec((tm, 1), lambda i, j: (i, 0))

    if stage in ("train", "sanity_check"):
        # ---- kernel 1: tiled masked exp-cosine rows (only the 2P used rows) ----
        rows_p = pl.pallas_call(
            functools.partial(_rows_kernel, n_rows=n_rows, n_cols=B,
                              inv_tau=inv_tau),
            grid=grid,
            in_specs=[row_spec, col_spec, idx_spec, idx_spec],
            out_specs=tile_spec,
            out_shape=jax.ShapeDtypeStruct((Pm, Bp), jnp.float32),
            compiler_params=pltpu.CompilerParams(
                dimension_semantics=("parallel", "parallel")),
        )(lhs_p, xn_cd, sel_col, par_col)

        # torch.quantile 'linear' == interpolate the two smallest of the top-k.
        # TODO(synk): row-wise selection stays in XLA (lax.top_k); much cheaper
        # than a full per-row sort and there is no clean Pallas equivalent.
        pos_q = alpha * (B - 1)
        idx_lo = int(math.floor(pos_q))
        frac = float(pos_q - idx_lo)
        k = B - idx_lo                                          # k >= 1
        topk = jax.lax.top_k(rows_p, k)[0]                      # (Pm, k) desc
        if k >= 2 and frac > 0.0:
            thr = topk[:, k - 1:k] * (1.0 - frac) + topk[:, k - 2:k - 1] * frac
        else:
            thr = topk[:, k - 1:k]
        thr = thr.astype(jnp.float32)

        # ---- kernel 2: column-tiled hard-negative loss, per-row outputs ----
        loss_rows = pl.pallas_call(
            _loss_kernel,
            grid=grid,
            in_specs=[tile_spec, idx_spec, idx_spec],
            out_specs=out_row_spec,
            out_shape=jax.ShapeDtypeStruct((Pm, 1), jnp.float32),
            scratch_shapes=[pltpu.VMEM((tm, 1), jnp.float32)],
            compiler_params=pltpu.CompilerParams(
                dimension_semantics=("parallel", "arbitrary")),
        )(rows_p, thr, pos_col)
    else:
        # ---- fused eval/val path: single memory pass, no (2P,B) intermediate ----
        loss_rows = pl.pallas_call(
            functools.partial(_fused_loss_kernel, n_rows=n_rows, n_cols=B,
                              inv_tau=inv_tau),
            grid=grid,
            in_specs=[row_spec, col_spec, idx_spec, idx_spec, idx_spec],
            out_specs=out_row_spec,
            out_shape=jax.ShapeDtypeStruct((Pm, 1), jnp.float32),
            scratch_shapes=[pltpu.VMEM((tm, 1), jnp.float32)],
            compiler_params=pltpu.CompilerParams(
                dimension_semantics=("parallel", "arbitrary")),
        )(lhs_p, xn_cd, sel_col, par_col, pos_col)

    # Padded rows contribute exactly 0 (all entries masked, pos=1), so the sum
    # over the padded vector equals the sum over the 2P real rows.
    return jnp.sum(loss_rows) / n_rows


def _reference(embeddings, positive_pairs, stage, tau=TAU, alpha=ALPHA):
    """Pure-JAX reference mirroring the PyTorch forward."""
    embeddings = embeddings.astype(jnp.float32)
    B = embeddings.shape[0]
    P = positive_pairs.shape[0]
    i_idx = positive_pairs[:, 0]
    j_idx = positive_pairs[:, 1]
    mask = jnp.eye(B, dtype=bool)
    mask = mask.at[i_idx, j_idx].set(True).at[j_idx, i_idx].set(True)
    n = jnp.sqrt(jnp.sum(embeddings * embeddings, axis=1, keepdims=True))
    xn = embeddings / jnp.maximum(n, EPS)
    cos = xn @ xn.T
    e = jnp.exp(cos / tau)
    em = jnp.where(mask, 0.0, e)
    pos_ij = e[i_idx, j_idx]
    pos_ji = e[j_idx, i_idx]
    exp_i = em[i_idx]
    exp_j = em[j_idx]
    if stage in ('train', 'sanity_check'):
        ti = jnp.quantile(exp_i, alpha, axis=1, keepdims=True)
        tj = jnp.quantile(exp_j, alpha, axis=1, keepdims=True)
        si = jnp.sum(jnp.where(exp_i >= ti, exp_i, 0.0), axis=1)
        sj = jnp.sum(jnp.where(exp_j >= tj, exp_j, 0.0), axis=1)
    else:
        si = exp_i.sum(axis=1)
        sj = exp_j.sum(axis=1)
    lij = -jnp.log(pos_ij / (pos_ij + si))
    lji = -jnp.log(pos_ji / (pos_ji + sj))
    return (lij + lji).sum() / (2 * P)


if __name__ == "__main__":
    key = jax.random.PRNGKey(0)
    B, D = 8, 32                      # batch_size, embedding_dim
    embeddings = jax.random.normal(key, (B, D), dtype=jnp.float32)
    positive_pairs = jnp.array([[0, 1], [2, 3], [4, 5], [6, 7]], dtype=jnp.int32)

    for stage in ("train", "val"):
        ref = _reference(embeddings, positive_pairs, stage)

        # Exact-math path (f32 MXU operands): tight tolerance vs f32 reference.
        out_f32 = jax.block_until_ready(
            hard_contrastive_loss_v3(embeddings, positive_pairs, stage,
                                     compute_dtype=jnp.float32))
        assert jnp.allclose(out_f32, ref, rtol=1e-3, atol=1e-3), (stage, out_f32, ref)

        # Performance default (bf16 MXU operands, f32 accumulation): looser
        # tolerance accounts for bf16 rounding of the cosine matrix.
        out_bf16 = jax.block_until_ready(
            hard_contrastive_loss_v3(embeddings, positive_pairs, stage))
        assert jnp.allclose(out_bf16, ref, rtol=3e-2, atol=3e-2), (stage, out_bf16, ref)

    print("KERNEL_OK")
</pallas_src>

<mosaic_0001>
module attributes {stable_mosaic.version = 11 : i64} {
  func.func @_normalize_kernel(%arg0: i32, %arg1: memref<8x32xf32, #tpu.memory_space<vmem>>, %arg2: memref<8x32xf32, #tpu.memory_space<vmem>>, %arg3: memref<8x32xf32, #tpu.memory_space<vmem>>) attributes {dimension_semantics = [#tpu.dimension_semantics<parallel>], iteration_bounds = array<i64: 1>, scalar_prefetch = 0 : i64, scratch_operands = 0 : i64, tpu.core_type = #tpu.core_type<tc>, window_params = [{transform_indices = @transform_0, window_bounds = array<i64: 8, 32>}, {transform_indices = @transform_1, window_bounds = array<i64: 8, 32>}, {transform_indices = @transform_2, window_bounds = array<i64: 8, 32>}]} {
    %c0 = arith.constant 0 : index
    %c0_0 = arith.constant 0 : index
    %0 = vector.load %arg1[%c0, %c0_0] : memref<8x32xf32, #tpu.memory_space<vmem>>, vector<8x32xf32>
    %1 = arith.mulf %0, %0 : vector<8x32xf32>
    %cst = arith.constant dense<0.000000e+00> : vector<8xf32>
    %2 = vector.multi_reduction <add>, %1, %cst [1] : vector<8x32xf32> to vector<8xf32>
    %3 = vector.shape_cast %2 : vector<8xf32> to vector<8x1xf32>
    %cst_1 = arith.constant 1.000000e-16 : f32
    %4 = vector.broadcast %cst_1 : f32 to vector<8x1xf32>
    %5 = arith.maximumf %3, %4 : vector<8x1xf32>
    %6 = math.rsqrt %5 : vector<8x1xf32>
    %7 = vector.broadcast %6 : vector<8x1xf32> to vector<8x32xf32>
    %8 = arith.mulf %0, %7 : vector<8x32xf32>
    %c0_2 = arith.constant 0 : index
    %c0_3 = arith.constant 0 : index
    %9 = vector.load %arg2[%c0_2, %c0_3] : memref<8x32xf32, #tpu.memory_space<vmem>>, vector<8x32xf32>
    tpu.vector_store %arg2[%c0_2, %c0_3], %8 {strides = array<i32>} : memref<8x32xf32, #tpu.memory_space<vmem>>, vector<8x32xf32>,
    %c0_4 = arith.constant 0 : index
    %c0_5 = arith.constant 0 : index
    %10 = vector.load %arg3[%c0_4, %c0_5] : memref<8x32xf32, #tpu.memory_space<vmem>>, vector<8x32xf32>
    tpu.vector_store %arg3[%c0_4, %c0_5], %8 {strides = array<i32>} : memref<8x32xf32, #tpu.memory_space<vmem>>, vector<8x32xf32>,
    return
  }
  func.func @transform_0(%arg0: i32) -> (i32, i32) {
    %c0_i32 = arith.constant 0 : i32
    %c0_i32_0 = arith.constant 0 : i32
    return %arg0, %c0_i32 : i32, i32
  }
  func.func @transform_1(%arg0: i32) -> (i32, i32) {
    %c0_i32 = arith.constant 0 : i32
    %c0_i32_0 = arith.constant 0 : i32
    return %arg0, %c0_i32 : i32, i32
  }
  func.func @transform_2(%arg0: i32) -> (i32, i32) {
    %c0_i32 = arith.constant 0 : i32
    %c0_i32_0 = arith.constant 0 : i32
    return %arg0, %c0_i32 : i32, i32
  }
}

module attributes {stable_mosaic.version = 11 : i64} {
  func.func @_rows_kernel(%arg0: i32, %arg1: i32, %arg2: memref<8x32xf32, #tpu.memory_space<vmem>>, %arg3: memref<8x32xf32, #tpu.memory_space<vmem>>, %arg4: memref<8x1xi32, #tpu.memory_space<vmem>>, %arg5: memref<8x1xi32, #tpu.memory_space<vmem>>, %arg6: memref<8x8xf32, #tpu.memory_space<vmem>>) attributes {dimension_semantics = [#tpu.dimension_semantics<parallel>, #tpu.dimension_semantics<parallel>], iteration_bounds = array<i64: 1, 1>, scalar_prefetch = 0 : i64, scratch_operands = 0 : i64, tpu.core_type = #tpu.core_type<tc>, window_params = [{transform_indices = @transform_0, window_bounds = array<i64: 8, 32>}, {transform_indices = @transform_1, window_bounds = array<i64: 8, 32>}, {transform_indices = @transform_2, window_bounds = array<i64: 8, 1>}, {transform_indices = @transform_3, window_bounds = array<i64: 8, 1>}, {transform_indices = @transform_4, window_bounds = array<i64: 8, 8>}]} {
    %c0 = arith.constant 0 : index
    %c0_0 = arith.constant 0 : index
    %0 = vector.load %arg2[%c0, %c0_0] : memref<8x32xf32, #tpu.memory_space<vmem>>, vector<8x32xf32>
    %c0_1 = arith.constant 0 : index
    %c0_2 = arith.constant 0 : index
    %1 = vector.load %arg3[%c0_1, %c0_2] : memref<8x32xf32, #tpu.memory_space<vmem>>, vector<8x32xf32>
    %cst = arith.constant dense<0.000000e+00> : vector<8x8xf32>
    %2 = tpu.matmul %0, %1, %cst {dimension_numbers = #tpu.dot_dimension_numbers<[1], [1], [0], [0], [0, 0, 1, 0], [], []>} : vector<8x32xf32>, vector<8x32xf32>, vector<8x8xf32> -> vector<8x8xf32>
    %cst_3 = arith.constant 5.000000e+00 : f32
    %3 = vector.broadcast %cst_3 : f32 to vector<8x8xf32>
    %4 = arith.mulf %2, %3 : vector<8x8xf32>
    %5 = math.exp %4 : vector<8x8xf32>
    %6 = tpu.iota {dimensions = array<i32: 1>} : vector<8x8xi32>
    %c8_i32 = arith.constant 8 : i32
    %7 = arith.muli %arg1, %c8_i32 : i32
    %8 = vector.broadcast %7 : i32 to vector<8x8xi32>
    %9 = arith.addi %6, %8 : vector<8x8xi32>
    %10 = tpu.iota {dimensions = array<i32: 0>} : vector<8x8xi32>
    %c8_i32_4 = arith.constant 8 : i32
    %11 = arith.muli %arg0, %c8_i32_4 : i32
    %12 = vector.broadcast %11 : i32 to vector<8x8xi32>
    %13 = arith.addi %10, %12 : vector<8x8xi32>
    %c0_5 = arith.constant 0 : index
    %c0_6 = arith.constant 0 : index
    %14 = vector.load %arg4[%c0_5, %c0_6] : memref<8x1xi32, #tpu.memory_space<vmem>>, vector<8x1xi32>
    %15 = vector.broadcast %14 : vector<8x1xi32> to vector<8x8xi32>
    %16 = arith.cmpi eq, %9, %15 : vector<8x8xi32>
    %c0_7 = arith.constant 0 : index
    %c0_8 = arith.constant 0 : index
    %17 = vector.load %arg5[%c0_7, %c0_8] : memref<8x1xi32, #tpu.memory_space<vmem>>, vector<8x1xi32>
    %18 = vector.broadcast %17 : vector<8x1xi32> to vector<8x8xi32>
    %19 = arith.cmpi eq, %9, %18 : vector<8x8xi32>
    %20 = arith.ori %16, %19 : vector<8x8xi1>
    %c8_i32_9 = arith.constant 8 : i32
    %21 = vector.broadcast %c8_i32_9 : i32 to vector<8x8xi32>
    %22 = arith.cmpi sge, %9, %21 : vector<8x8xi32>
    %23 = arith.ori %20, %22 : vector<8x8xi1>
    %c8_i32_10 = arith.constant 8 : i32
    %24 = vector.broadcast %c8_i32_10 : i32 to vector<8x8xi32>
    %25 = arith.cmpi sge, %13, %24 : vector<8x8xi32>
    %26 = arith.ori %23, %25 : vector<8x8xi1>
    %cst_11 = arith.constant 0.000000e+00 : f32
    %27 = vector.broadcast %cst_11 : f32 to vector<8x8xf32>
    %28 = arith.select %26, %27, %5 : vector<8x8xi1>, vector<8x8xf32>
    %c0_12 = arith.constant 0 : index
    %c0_13 = arith.constant 0 : index
    %29 = vector.load %arg6[%c0_12, %c0_13] : memref<8x8xf32, #tpu.memory_space<vmem>>, vector<8x8xf32>
    tpu.vector_store %arg6[%c0_12, %c0_13], %28 {strides = array<i32>} : memref<8x8xf32, #tpu.memory_space<vmem>>, vector<8x8xf32>,
    return
  }
  func.func @transform_0(%arg0: i32, %arg1: i32) -> (i32, i32) {
    %c0_i32 = arith.constant 0 : i32
    %c0_i32_0 = arith.constant 0 : i32
    return %arg0, %c0_i32 : i32, i32
  }
  func.func @transform_1(%arg0: i32, %arg1: i32) -> (i32, i32) {
    %c0_i32 = arith.constant 0 : i32
    %c0_i32_0 = arith.constant 0 : i32
    return %arg1, %c0_i32 : i32, i32
  }
  func.func @transform_2(%arg0: i32, %arg1: i32) -> (i32, i32) {
    %c0_i32 = arith.constant 0 : i32
    %c0_i32_0 = arith.constant 0 : i32
    return %arg0, %c0_i32 : i32, i32
  }
  func.func @transform_3(%arg0: i32, %arg1: i32) -> (i32, i32) {
    %c0_i32 = arith.constant 0 : i32
    %c0_i32_0 = arith.constant 0 : i32
    return %arg0, %c0_i32 : i32, i32
  }
  func.func @transform_4(%arg0: i32, %arg1: i32) -> (i32, i32) {
    %c0_i32 = arith.constant 0 : i32
    return %arg0, %arg1 : i32, i32
  }
}

module attributes {stable_mosaic.version = 11 : i64} {
  func.func @_loss_kernel(%arg0: i32, %arg1: i32, %arg2: memref<8x8xf32, #tpu.memory_space<vmem>>, %arg3: memref<8x1xf32, #tpu.memory_space<vmem>>, %arg4: memref<8x1xf32, #tpu.memory_space<vmem>>, %arg5: memref<8x1xf32, #tpu.memory_space<vmem>>, %arg6: memref<8x1xf32, #tpu.memory_space<vmem>>) attributes {dimension_semantics = [#tpu.dimension_semantics<parallel>, #tpu.dimension_semantics<arbitrary>], iteration_bounds = array<i64: 1, 1>, scalar_prefetch = 0 : i64, scratch_operands = 1 : i64, tpu.core_type = #tpu.core_type<tc>, window_params = [{transform_indices = @transform_0, window_bounds = array<i64: 8, 8>}, {transform_indices = @transform_1, window_bounds = array<i64: 8, 1>}, {transform_indices = @transform_2, window_bounds = array<i64: 8, 1>}, {transform_indices = @transform_3, window_bounds = array<i64: 8, 1>}]} {
    %c0_i32 = arith.constant 0 : i32
    %0 = arith.cmpi eq, %arg1, %c0_i32 : i32
    %1 = arith.extui %0 : i1 to i32
    %c0_i32_0 = arith.constant 0 : i32
    %2 = arith.cmpi ne, %1, %c0_i32_0 : i32
    scf.if %2 {
      %cst_11 = arith.constant 0.000000e+00 : f32
      %17 = vector.broadcast %cst_11 : f32 to vector<8x1xf32>
      %c0_12 = arith.constant 0 : index
      %c0_13 = arith.constant 0 : index
      %18 = vector.load %arg6[%c0_12, %c0_13] : memref<8x1xf32, #tpu.memory_space<vmem>>, vector<8x1xf32>
      tpu.vector_store %arg6[%c0_12, %c0_13], %17 {strides = array<i32>} : memref<8x1xf32, #tpu.memory_space<vmem>>, vector<8x1xf32>,
    } else {
    }
    %c0 = arith.constant 0 : index
    %c0_1 = arith.constant 0 : index
    %3 = vector.load %arg2[%c0, %c0_1] : memref<8x8xf32, #tpu.memory_space<vmem>>, vector<8x8xf32>
    %c0_2 = arith.constant 0 : index
    %c0_3 = arith.constant 0 : index
    %4 = vector.load %arg3[%c0_2, %c0_3] : memref<8x1xf32, #tpu.memory_space<vmem>>, vector<8x1xf32>
    %c0_4 = arith.constant 0 : index
    %c0_5 = arith.constant 0 : index
    %5 = vector.load %arg6[%c0_4, %c0_5] : memref<8x1xf32, #tpu.memory_space<vmem>>, vector<8x1xf32>
    %6 = vector.broadcast %4 : vector<8x1xf32> to vector<8x8xf32>
    %7 = arith.cmpf oge, %3, %6 : vector<8x8xf32>
    %cst = arith.constant 0.000000e+00 : f32
    %8 = vector.broadcast %cst : f32 to vector<8x8xf32>
    %9 = arith.select %7, %3, %8 : vector<8x8xi1>, vector<8x8xf32>
    %cst_6 = arith.constant dense<0.000000e+00> : vector<8xf32>
    %10 = vector.multi_reduction <add>, %9, %cst_6 [1] : vector<8x8xf32> to vector<8xf32>
    %11 = vector.shape_cast %10 : vector<8xf32> to vector<8x1xf32>
    %12 = arith.addf %5, %11 : vector<8x1xf32>
    %c0_7 = arith.constant 0 : index
    %c0_8 = arith.constant 0 : index
    %13 = vector.load %arg6[%c0_7, %c0_8] : memref<8x1xf32, #tpu.memory_space<vmem>>, vector<8x1xf32>
    tpu.vector_store %arg6[%c0_7, %c0_8], %12 {strides = array<i32>} : memref<8x1xf32, #tpu.memory_space<vmem>>, vector<8x1xf32>,
    %c0_i32_9 = arith.constant 0 : i32
    %14 = arith.cmpi eq, %arg1, %c0_i32_9 : i32
    %15 = arith.extui %14 : i1 to i32
    %c0_i32_10 = arith.constant 0 : i32
    %16 = arith.cmpi ne, %15, %c0_i32_10 : i32
    scf.if %16 {
      %c0_11 = arith.constant 0 : index
      %c0_12 = arith.constant 0 : index
      %17 = vector.load %arg4[%c0_11, %c0_12] : memref<8x1xf32, #tpu.memory_space<vmem>>, vector<8x1xf32>
      %c0_13 = arith.constant 0 : index
      %c0_14 = arith.constant 0 : index
      %18 = vector.load %arg6[%c0_13, %c0_14] : memref<8x1xf32, #tpu.memory_space<vmem>>, vector<8x1xf32>
      %19 = arith.addf %17, %18 : vector<8x1xf32>
      %20 = arith.divf %17, %19 : vector<8x1xf32>
      %21 = math.log %20 : vector<8x1xf32>
      %cst_15 = arith.constant 0.000000e+00 : f32
      %22 = vector.broadcast %cst_15 : f32 to vector<8x1xf32>
      %23 = arith.subf %22, %21 : vector<8x1xf32>
      %c0_16 = arith.constant 0 : index
      %c0_17 = arith.constant 0 : index
      %24 = vector.load %arg5[%c0_16, %c0_17] : memref<8x1xf32, #tpu.memory_space<vmem>>, vector<8x1xf32>
      tpu.vector_store %arg5[%c0_16, %c0_17], %23 {strides = array<i32>} : memref<8x1xf32, #tpu.memory_space<vmem>>, vector<8x1xf32>,
    } else {
    }
    return
  }
  func.func @transform_0(%arg0: i32, %arg1: i32) -> (i32, i32) {
    %c0_i32 = arith.constant 0 : i32
    return %arg0, %arg1 : i32, i32
  }
  func.func @transform_1(%arg0: i32, %arg1: i32) -> (i32, i32) {
    %c0_i32 = arith.constant 0 : i32
    %c0_i32_0 = arith.constant 0 : i32
    return %arg0, %c0_i32 : i32, i32
  }
  func.func @transform_2(%arg0: i32, %arg1: i32) -> (i32, i32) {
    %c0_i32 = arith.constant 0 : i32
    %c0_i32_0 = arith.constant 0 : i32
    return %arg0, %c0_i32 : i32, i32
  }
  func.func @transform_3(%arg0: i32, %arg1: i32) -> (i32, i32) {
    %c0_i32 = arith.constant 0 : i32
    %c0_i32_0 = arith.constant 0 : i32
    return %arg0, %c0_i32 : i32, i32
  }
}

</mosaic_0001>

<llo_original>
// kernel: hard_contrastive_loss_v3.3
$region0: #{hard_contrastive_loss_v3.3}
  #allocation0 [shape = 'u32[]', space=smem, size = 0x4, offset = 0x4, fixed_abs, tag = 'smem constant byte address 0x4 - core index']
  #allocation1 [shape = 'u32[144,128]{1,0:T(1,128)}', space=vmem, size = 0x12000, scoped, tag = 'internal scratch']
  %s0 = inlined_call_operand.vmem [shape: f32[8,32], index: 0, kind: input, shape index: {}]
  %s1 = inlined_call_operand.vmem [shape: f32[8,32], index: 1, kind: output, shape index: {0}]
  %s2 = inlined_call_operand.vmem [shape: f32[8,32], index: 2, kind: output, shape index: {1}]
  %3 = xla_tuple %s1, %s2
  %s4 = sld [smem:[#allocation0]]
  $region22: #{hard_contrastive_loss_v3.3} parent=0
    _
  %s6 = ssub.s32 1, %s4
  %s7 = scalar_select 0, %s6, %s4
  // Predicated region
  $region2: #{hard_contrastive_loss_v3.3} parent=0 // pred_check
    _
  $region3: #{hard_contrastive_loss_v3.3} parent=0 // pred_check_branch
    %9 = sbr.rel (0) target = $region5
  $region4: #{hard_contrastive_loss_v3.3} parent=0 // pred_region
    _
  $region5: #{hard_contrastive_loss_v3.3} parent=0 // pred_fallthru
    _
  %v10 = vld [vmem:[%s0] sm:$0xff]
  %v11 = vmul.f32 %v10, %v10
  %vm12 = vcmask 261120
  %v13 = vsel %vm12, %v11, 0.0
  %14 = vadd.xlane.f32.xlu0 %v13
  %v15 = vpop.xlane.xlu0 %14
  %v16 = vmax.f32 %v15, 1e-16
  %v17 = vrsqrt.pop %v16
  %v18 = vmul.f32 %v10, %v17
  %19 = vst.msk [vmem:[%s1] sm:$0xff] %vm12, %v18
  %20 = vst.msk [vmem:[%s2] sm:$0xff] %vm12, %v18
  // Predicated region
  $region6: #{hard_contrastive_loss_v3.3} parent=0 // pred_check
    _
  $region7: #{hard_contrastive_loss_v3.3} parent=0 // pred_check_branch
    %22 = sbr.rel (0) target = $region9
  $region8: #{hard_contrastive_loss_v3.3} parent=0 // pred_region
    _
  $region9: #{hard_contrastive_loss_v3.3} parent=0 // pred_fallthru
    _
  // Predicated region
  $region10: #{hard_contrastive_loss_v3.3} parent=0 // pred_check
    _
  $region11: #{hard_contrastive_loss_v3.3} parent=0 // pred_check_branch
    %24 = sbr.rel (0) target = $region13
  $region12: #{hard_contrastive_loss_v3.3} parent=0 // pred_region
    _
  $region13: #{hard_contrastive_loss_v3.3} parent=0 // pred_fallthru
    _
  // Predicated region
  $region14: #{hard_contrastive_loss_v3.3} parent=0 // pred_check
    _
  $region15: #{hard_contrastive_loss_v3.3} parent=0 // pred_check_branch
    %26 = sbr.rel (0) target = $region17
  $region16: #{hard_contrastive_loss_v3.3} parent=0 // pred_region
    _
  $region17: #{hard_contrastive_loss_v3.3} parent=0 // pred_fallthru
    _
  // Predicated region
  $region18: #{hard_contrastive_loss_v3.3} parent=0 // pred_check
    _
  $region19: #{hard_contrastive_loss_v3.3} parent=0 // pred_check_branch
    %28 = sbr.rel (0) target = $region21
  $region20: #{hard_contrastive_loss_v3.3} parent=0 // pred_region
    _
  $region21: #{hard_contrastive_loss_v3.3} parent=0 // pred_fallthru
    _

// kernel: hard_contrastive_loss_v3.4
$region0: #{hard_contrastive_loss_v3.4}
  #allocation0 [shape = 'u32[]', space=smem, size = 0x4, offset = 0x4, fixed_abs, tag = 'smem constant byte address 0x4 - core index']
  #allocation1 [shape = 'u32[144,128]{1,0:T(1,128)}', space=vmem, size = 0x12000, scoped, tag = 'internal scratch']
  %s0 = inlined_call_operand.vmem [shape: f32[8,32], index: 0, kind: input, shape index: {}]
  %s1 = inlined_call_operand.vmem [shape: f32[8,32], index: 1, kind: input, shape index: {}]
  %s2 = inlined_call_operand.vmem [shape: s32[8,1], index: 2, kind: input, shape index: {}]
  %s3 = inlined_call_operand.vmem [shape: s32[8,1], index: 3, kind: input, shape index: {}]
  %s4 = inlined_call_operand.vmem [shape: f32[8,8], index: 4, kind: output, shape index: {}]
  %s5 = sld [smem:[#allocation0]]
  $region26: #{hard_contrastive_loss_v3.4} parent=0
    _
  %s7 = ssub.s32 1, %s5
  %s8 = scalar_select 0, %s7, %s5
  // Predicated region
  $region2: #{hard_contrastive_loss_v3.4} parent=0 // pred_check
    _
  $region3: #{hard_contrastive_loss_v3.4} parent=0 // pred_check_branch
    %10 = sbr.rel (0) target = $region5
  $region4: #{hard_contrastive_loss_v3.4} parent=0 // pred_region
    _
  $region5: #{hard_contrastive_loss_v3.4} parent=0 // pred_fallthru
    _
  // Predicated region
  $region6: #{hard_contrastive_loss_v3.4} parent=0 // pred_check
    _
  $region7: #{hard_contrastive_loss_v3.4} parent=0 // pred_check_branch
    %12 = sbr.rel (0) target = $region9
  $region8: #{hard_contrastive_loss_v3.4} parent=0 // pred_region
    _
  $region9: #{hard_contrastive_loss_v3.4} parent=0 // pred_fallthru
    _
  // Predicated region
  $region10: #{hard_contrastive_loss_v3.4} parent=0 // pred_check
    _
  $region11: #{hard_contrastive_loss_v3.4} parent=0 // pred_check_branch
    %14 = sbr.rel (0) target = $region13
  $region12: #{hard_contrastive_loss_v3.4} parent=0 // pred_region
    _
  $region13: #{hard_contrastive_loss_v3.4} parent=0 // pred_fallthru
    _
  // Predicated region
  $region14: #{hard_contrastive_loss_v3.4} parent=0 // pred_check
    _
  $region15: #{hard_contrastive_loss_v3.4} parent=0 // pred_check_branch
    %16 = sbr.rel (0) target = $region17
  $region16: #{hard_contrastive_loss_v3.4} parent=0 // pred_region
    _
  $region17: #{hard_contrastive_loss_v3.4} parent=0 // pred_fallthru
    _
  %v17 = vld [vmem:[%s0] sm:$0xff]
  %v18 = vld [vmem:[%s1] sm:$0xff]
  %vm19 = vcmask 261120
  %v21 = vsel %vm19, %v17, 0
  %v24 = vsel %vm19, %v18, 0
  %26 = vmatprep.subr.mxu0 0.0
  %27 = vmatpush1.xpose.msra.mxu0 %v24
  %28 = vmatprep.subr.mxu0 0.0
  %29 = vmatpush1.xpose.msra.mxu0 0.0
  %30 = vmatprep.subr.mxu0 0.0
  %31 = vmatpush1.xpose.msra.mxu0 0.0
  %32 = vmatprep.subr.mxu0 0.0
  %33 = vmatpush1.xpose.msra.mxu0 0.0
  %34 = vmatprep.subr.mxu0 0.0
  %35 = vmatpush1.xpose.msra.mxu0 0.0
  %36 = vmatprep.subr.mxu0 0.0
  %37 = vmatpush1.xpose.msra.mxu0 0.0
  %38 = vmatprep.subr.mxu0 0.0
  %39 = vmatpush1.xpose.msra.mxu0 0.0
  %40 = vmatprep.subr.mxu0 0.0
  %41 = vmatpush1.xpose.msra.mxu0 0.0
  %42 = vmatprep.subr.mxu0 0.0
  %43 = vmatpush1.xpose.msra.mxu0 0.0
  %44 = vmatprep.subr.mxu0 0.0
  %45 = vmatpush1.xpose.msra.mxu0 0.0
  %46 = vmatprep.subr.mxu0 0.0
  %47 = vmatpush1.xpose.msra.mxu0 0.0
  %48 = vmatprep.subr.mxu0 0.0
  %49 = vmatpush1.xpose.msra.mxu0 0.0
  %50 = vmatprep.subr.mxu0 0.0
  %51 = vmatpush1.xpose.msra.mxu0 0.0
  %52 = vmatprep.subr.mxu0 0.0
  %53 = vmatpush1.xpose.msra.mxu0 0.0
  %54 = vmatprep.subr.mxu0 0.0
  %55 = vmatpush1.xpose.msra.mxu0 0.0
  %56 = vmatprep.subr.mxu0 0.0
  %57 = vmatpush1.xpose.msra.mxu0 0.0
  %58 = vmatprep.subr.mxu0 0.0
  %59 = vmatpush1.xpose.msra.mxu0 0.0
  %60 = vmatprep.subr.mxu0 0.0
  %61 = vmatpush1.xpose.msra.mxu0 0.0
  %62 = vmatprep.subr.mxu0 0.0
  %63 = vmatpush1.xpose.msra.mxu0 0.0
  %64 = vmatprep.subr.mxu0 0.0
  %65 = vmatpush1.xpose.msra.mxu0 0.0
  %66 = vmatprep.subr.mxu0 0.0
  %67 = vmatpush1.xpose.msra.mxu0 0.0
  %68 = vmatprep.subr.mxu0 0.0
  %69 = vmatpush1.xpose.msra.mxu0 0.0
  %70 = vmatprep.subr.mxu0 0.0
  %71 = vmatpush1.xpose.msra.mxu0 0.0
  %72 = vmatprep.subr.mxu0 0.0
  %73 = vmatpush1.xpose.msra.mxu0 0.0
  %74 = vmatprep.subr.mxu0 0.0
  %75 = vmatpush1.xpose.msra.mxu0 0.0
  %76 = vmatprep.subr.mxu0 0.0
  %77 = vmatpush1.xpose.msra.mxu0 0.0
  %78 = vmatprep.subr.mxu0 0.0
  %79 = vmatpush1.xpose.msra.mxu0 0.0
  %80 = vmatprep.subr.mxu0 0.0
  %81 = vmatpush1.xpose.msra.mxu0 0.0
  %82 = vmatprep.subr.mxu0 0.0
  %83 = vmatpush1.xpose.msra.mxu0 0.0
  %84 = vmatprep.subr.mxu0 0.0
  %85 = vmatpush1.xpose.msra.mxu0 0.0
  %86 = vmatprep.subr.mxu0 0.0
  %87 = vmatpush1.xpose.msra.mxu0 0.0
  %88 = vmatprep.subr.mxu0 0.0
  %89 = vmatpush1.xpose.msra.mxu0 0.0
  %90 = vmatprep.mubr.f32.mxu0 0.0
  %91 = vmatmul.mubr.f32.gmra.mrb[0].mxu0 %v21
  %v92 = vpop.f32.mrb[0].mxu0
  %v93 = vadd.f32 0.0, %v92
  %v94 = vpop.f32.mrb[0].mxu0
  %95 = vdwg.mxu0
  %v96 = vmul.f32 %v93, 5.0
  %v97 = vmul.f32 %v96, 1.442695
  %v98 = vpow.pop %v97
  %v99 = vlaneseq
  %v100 = vand.u32 %v99, 127
  %s101 = smul.u32 0, 8
  %v102 = vstv %s101
  %v103 = vadd.s32 %v100, %v102
  %v104 = vlaneseq
  %v105 = vshrl.u32 %v104, 7
  %s106 = smul.u32 0, 8
  %v107 = vstv %s106
  %v108 = vadd.s32 %v105, %v107
  %v109 = vld [vmem:[%s2] sm:$0xff]
  %110 = vset.pattern.permute.xlu0 0
  %111 = vperm.xlu0 %110, %v109
  %v112 = vpop.permute.xlu0 %111
  %vm113 = vcmp.eq.s32.totalorder %v103, %v112
  %v114 = vld [vmem:[%s3] sm:$0xff]
  %115 = vset.pattern.permute.xlu0 0
  %116 = vperm.xlu0 %115, %v114
  %v117 = vpop.permute.xlu0 %116
  %vm118 = vcmp.eq.s32.totalorder %v103, %v117
  %vm119 = vmor %vm113, %vm118
  %vm120 = vcmp.ge.s32.totalorder %v103, 8
  %vm121 = vmor %vm119, %vm120
  %vm122 = vcmp.ge.s32.totalorder %v108, 8
  %vm123 = vmor %vm121, %vm122
  %v124 = vsel %vm123, 0.0, %v98
  %vm125 = vcmask 64512
  %126 = vst.msk [vmem:[%s4] sm:$0xff] %vm125, %v124
  // Predicated region
  $region18: #{hard_contrastive_loss_v3.4} parent=0 // pred_check
    _
  $region19: #{hard_contrastive_loss_v3.4} parent=0 // pred_check_branch
    %128 = sbr.rel (0) target = $region21
  $region20: #{hard_contrastive_loss_v3.4} parent=0 // pred_region
    _
  $region21: #{hard_contrastive_loss_v3.4} parent=0 // pred_fallthru
    _
  // Predicated region
  $region22: #{hard_contrastive_loss_v3.4} parent=0 // pred_check
    _
  $region23: #{hard_contrastive_loss_v3.4} parent=0 // pred_check_branch
    %130 = sbr.rel (0) target = $region25
  $region24: #{hard_contrastive_loss_v3.4} parent=0 // pred_region
    _
  $region25: #{hard_contrastive_loss_v3.4} parent=0 // pred_fallthru
    _

// kernel: hard_contrastive_loss_v3.5
$region0: #{hard_contrastive_loss_v3.5}
  #allocation0 [shape = 'u32[]', space=smem, size = 0x4, offset = 0x4, fixed_abs, tag = 'smem constant byte address 0x4 - core index']
  #allocation1 [shape = 'u32[144,128]{1,0:T(1,128)}', space=vmem, size = 0x12000, scoped, tag = 'internal scratch']
  #allocation2 [shape = 'f32[8,1]{1,0:T(8,128)}', space=vmem, size = 0x1000, scoped, tag = 'scratch operand']
  %s0 = inlined_call_operand.vmem [shape: f32[8,8], index: 0, kind: input, shape index: {}]
  %s1 = inlined_call_operand.vmem [shape: f32[8,1], index: 1, kind: input, shape index: {}]
  %s2 = inlined_call_operand.vmem [shape: f32[8,1], index: 2, kind: input, shape index: {}]
  %s3 = inlined_call_operand.vmem [shape: f32[8,1], index: 3, kind: output, shape index: {}]
  %s4 = sld [smem:[#allocation0]]
  $region30: #{hard_contrastive_loss_v3.5} parent=0
    _
  %s6 = ssub.s32 1, %s4
  %s7 = scalar_select 0, %s6, %s4
  // Predicated region
  $region2: #{hard_contrastive_loss_v3.5} parent=0 // pred_check
    _
  $region3: #{hard_contrastive_loss_v3.5} parent=0 // pred_check_branch
    %9 = sbr.rel (0) target = $region5
  $region4: #{hard_contrastive_loss_v3.5} parent=0 // pred_region
    _
  $region5: #{hard_contrastive_loss_v3.5} parent=0 // pred_fallthru
    _
  // Predicated region
  $region6: #{hard_contrastive_loss_v3.5} parent=0 // pred_check
    _
  $region7: #{hard_contrastive_loss_v3.5} parent=0 // pred_check_branch
    %11 = sbr.rel (0) target = $region9
  $region8: #{hard_contrastive_loss_v3.5} parent=0 // pred_region
    _
  $region9: #{hard_contrastive_loss_v3.5} parent=0 // pred_fallthru
    _
  // Predicated region
  $region10: #{hard_contrastive_loss_v3.5} parent=0 // pred_check
    _
  $region11: #{hard_contrastive_loss_v3.5} parent=0 // pred_check_branch
    %13 = sbr.rel (0) target = $region13
  $region12: #{hard_contrastive_loss_v3.5} parent=0 // pred_region
    _
  $region13: #{hard_contrastive_loss_v3.5} parent=0 // pred_fallthru
    _
  %p14 = scmp.eq.s32.totalorder 0, 0
  // Predicated region
  $region14: #{hard_contrastive_loss_v3.5} parent=0 // pred_check
    %p15 = pneg %p14
  $region15: #{hard_contrastive_loss_v3.5} parent=0 // pred_check_branch
    %17 = sbr.rel (%p15) target = $region17
  $region16: #{hard_contrastive_loss_v3.5} parent=0 // pred_region
    %vm18 = vcmask 7168
    %19 = vst.msk [vmem:[#allocation2] sm:$0xff] %vm18, 0.0
  $region17: #{hard_contrastive_loss_v3.5} parent=0 // pred_fallthru
    _
  %v20 = vld [vmem:[%s0] sm:$0xff]
  %v21 = vld [vmem:[%s1] sm:$0xff]
  %v22 = vld [vmem:[#allocation2] sm:$0xff]
  %24 = vset.pattern.permute.xlu0 0
  %25 = vperm.xlu0 %24, %v21
  %v26 = vpop.permute.xlu0 %25
  %vm28 = vcmp.ge.f32.partialorder %v20, %v26
  %v29 = vsel %vm28, %v20, 0.0
  %vm30 = vcmask 64512
  %v31 = vsel %vm30, %v29, 0.0
  %32 = vadd.xlane.f32.xlu0 %v31
  %v33 = vpop.xlane.xlu0 %32
  %v34 = vadd.f32 %v22, %v33
  %vm35 = vcmask 7168
  %36 = vst.msk [vmem:[#allocation2] sm:$0xff] %vm35, %v34
  // Predicated region
  $region18: #{hard_contrastive_loss_v3.5} parent=0 // pred_check
    %p37 = pneg %p14
  $region19: #{hard_contrastive_loss_v3.5} parent=0 // pred_check_branch
    %39 = sbr.rel (%p37) target = $region21
  $region20: #{hard_contrastive_loss_v3.5} parent=0 // pred_region
    %v40 = vld [vmem:[%s2] sm:$0xff]
    %v41 = vld [vmem:[#allocation2] sm:$0xff]
    %v42 = vadd.f32 %v40, %v41
    %v43 = vrcp.pop %v42
    %v44 = vmul.f32 %v40, %v43
    %v45 = vlog2.pop %v44
    %v46 = vmul.f32 %v45, 0.6931472
    %v47 = vsub.f32 0.0, %v46
    %48 = vst.msk [vmem:[%s3] sm:$0xff] %vm35, %v47
  $region21: #{hard_contrastive_loss_v3.5} parent=0 // pred_fallthru
    _
  // Predicated region
  $region22: #{hard_contrastive_loss_v3.5} parent=0 // pred_check
    _
  $region23: #{hard_contrastive_loss_v3.5} parent=0 // pred_check_branch
    %50 = sbr.rel (0) target = $region25
  $region24: #{hard_contrastive_loss_v3.5} parent=0 // pred_region
    _
  $region25: #{hard_contrastive_loss_v3.5} parent=0 // pred_fallthru
    _
  // Predicated region
  $region26: #{hard_contrastive_loss_v3.5} parent=0 // pred_check
    _
  $region27: #{hard_contrastive_loss_v3.5} parent=0 // pred_check_branch
    %52 = sbr.rel (0) target = $region29
  $region28: #{hard_contrastive_loss_v3.5} parent=0 // pred_region
    _
  $region29: #{hard_contrastive_loss_v3.5} parent=0 // pred_fallthru
    _

</llo_original>
